<compile_context>
chip_gen: v7x
topology: tpu7x:2x2x1
jax: 0.10.0
libtpu: 0.0.40
codegen_flags: <defaults>
</compile_context>

<pallas_src>
import functools

import jax
import jax.numpy as jnp
from jax.experimental import pallas as pl
from jax.experimental.pallas import tpu as pltpu

_LANE = 128


def _round_up(x, m):
    return (x + m - 1) // m * m


def _cdiv(a, b):
    return -(-a // b)


# ----------------------------------------------------------------------------- kernel


def _make_mlp_kernel(num_layers):
    """Kernel args: (x_ref, w0, b0, w1, b1, ..., o_ref)."""

    def kernel(*refs):
        x_ref = refs[0]
        p = refs[1:-1]
        o_ref = refs[-1]

        h = x_ref[...]
        idx = 0
        for _ in range(num_layers):
            w = p[idx][...]
            b = p[idx + 1][...]
            idx += 2
            h = (jnp.dot(h.astype(w.dtype), w, preferred_element_type=jnp.float32)
                 + b.astype(jnp.float32))
            # utils.MLP(sizes, batchnorm=False): ReLU after every Linear.
            h = jnp.maximum(h, 0.0)

        o_ref[...] = h.astype(o_ref.dtype)

    return kernel


# ----------------------------------------------------------------------------- params


def init_mlp_params(key, sizes, dtype=jnp.float32):
    """Deterministic PyTorch-Linear-style init: U(-1/sqrt(fan_in), 1/sqrt(fan_in))."""
    params = []
    for i in range(len(sizes) - 1):
        fan_in, fan_out = sizes[i], sizes[i + 1]
        key, kw, kb = jax.random.split(key, 3)
        bound = 1.0 / (fan_in ** 0.5)
        w = jax.random.uniform(kw, (fan_in, fan_out), dtype, -bound, bound)
        b = jax.random.uniform(kb, (1, fan_out), dtype, -bound, bound)
        params.append((w, b))
    return params


def prepare_params(params, dtype=None):
    """Host-side, one-time param prep:
       - zero-pad every layer's output width to a multiple of 128 lanes,
       - zero-pad the input width of layers > 0 to match the padded previous
         output (zero lanes stay exactly zero through Linear+ReLU),
       - optionally cast weights to `dtype` (e.g. bf16); biases stay f32.
    Returns flat list [w0, b0, w1, b1, ...]."""
    prepared = []
    for l, (w, b) in enumerate(params):
        fan_in, fan_out = w.shape
        out_pad = _round_up(fan_out, _LANE)
        wp = jnp.pad(w, ((0, 0), (0, out_pad - fan_out)))
        bp = jnp.pad(b.reshape(1, -1), ((0, 0), (0, out_pad - fan_out)))
        if l > 0:
            in_pad = _round_up(fan_in, _LANE)
            wp = jnp.pad(wp, ((0, in_pad - fan_in), (0, 0)))
        if dtype is not None:
            wp = wp.astype(dtype)
        prepared += [wp, bp.astype(jnp.float32)]
    return prepared


# ----------------------------------------------------------------------------- sizing


@functools.lru_cache(maxsize=None)
def _vmem_budget_bytes():
    """~3/4 of physical VMEM: ≈96 MiB on v5e/v6e (128 MiB), ≈48 MiB on v7x (64 MiB)."""
    cap = 64 * 1024 * 1024
    try:
        cap = int(pltpu.get_tpu_info().vmem_capacity_bytes)
    except Exception:
        pass
    return max(16 * 1024 * 1024, (cap * 3) // 4)


@functools.lru_cache(maxsize=None)
def _is_multicore_chip():
    try:
        return "v7" in jax.devices()[0].device_kind.lower()
    except Exception:
        return False


def _pick_tiling(rows, in_dim, layer_widths, vmem_budget):
    """Balanced row tiling: biggest tile (<=1024 rows) fitting ~half the VMEM
    budget; padding waste bounded to < one sublane group per tile."""
    max_w = max(layer_widths)
    out_w = layer_widths[-1]
    # f32 bytes per row resident at once: double-buffered input + output tile
    # plus headroom for two intermediate activations.
    per_row = 4 * (2 * in_dim + 2 * out_w + 2 * max_w)
    tm_cap = (vmem_budget // 2) // max(per_row, 1)
    tm_cap = max(8, min(1024, (tm_cap // 8) * 8))
    num_tiles = max(1, _cdiv(rows, tm_cap))
    tm = _round_up(_cdiv(rows, num_tiles), 8)
    rows_pad = num_tiles * tm
    return tm, rows_pad, num_tiles


# ----------------------------------------------------------------------------- forward


@functools.partial(
    jax.jit,
    static_argnames=("out_dim", "tm", "rows_pad", "semantics", "single_buffer_weights"),
)
def _encoder_impl(support_x, support_y, prepared_params, *, out_dim, tm, rows_pad,
                  semantics, single_buffer_weights):
    B, N, Fx = support_x.shape
    Fy = support_y.shape[-1]
    rows = B * N
    in_dim = Fx + Fy

    # Single tiny host-side concat (fused by XLA) -> one K=Fx+Fy matmul in layer 0.
    x2 = jnp.concatenate(
        [support_x.reshape(rows, Fx), support_y.reshape(rows, Fy)], axis=-1)
    if rows_pad != rows:
        x2 = jnp.pad(x2, ((0, rows_pad - rows), (0, 0)))

    num_layers = len(prepared_params) // 2
    out_pad = prepared_params[-1].shape[-1]  # padded width of last layer

    weight_kwargs = {}
    if single_buffer_weights:
        # Constant index map -> fetched once; one buffer is enough.
        weight_kwargs["pipeline_mode"] = pl.Buffered(1)

    in_specs = [pl.BlockSpec((tm, in_dim), lambda i: (i, 0))]
    for p in prepared_params:  # weights/biases stay resident in VMEM
        in_specs.append(pl.BlockSpec(p.shape, lambda i: (0, 0), **weight_kwargs))

    if semantics == "core_parallel":
        dim_sem = (pltpu.CORE_PARALLEL,)
    else:
        dim_sem = (semantics,)

    out = pl.pallas_call(
        _make_mlp_kernel(num_layers),
        out_shape=jax.ShapeDtypeStruct((rows_pad, out_pad), support_x.dtype),
        grid=(rows_pad // tm,),
        in_specs=in_specs,
        out_specs=pl.BlockSpec((tm, out_pad), lambda i: (i, 0)),
        compiler_params=pltpu.CompilerParams(
            dimension_semantics=dim_sem,
            vmem_limit_bytes=_vmem_budget_bytes(),
        ),
    )(x2, *prepared_params)

    # Drop row/lane padding; x.view(*x.shape[:-1], -1) in the reference is a no-op.
    return out[:rows, :out_dim].reshape(B, N, out_dim)


def encoder_forward(support_x, support_y, prepared_params, *, out_dim):
    """support_x: (B, N, Fx), support_y: (B, N, Fy) -> (B, N, out_dim)."""
    B, N, Fx = support_x.shape
    rows = B * N
    in_dim = Fx + support_y.shape[-1]
    layer_widths = [p.shape[-1] for p in prepared_params[1::2]]

    tm, rows_pad, num_tiles = _pick_tiling(rows, in_dim, layer_widths,
                                           _vmem_budget_bytes())

    # Preferred config first; fall back gracefully if the installed JAX / chip
    # rejects CORE_PARALLEL or single-buffered weight specs.
    attempts = []
    if _is_multicore_chip() and num_tiles >= 2:
        attempts.append(("core_parallel", True))
    attempts.append(("parallel", True))
    attempts.append(("parallel", False))

    last_err = None
    for sem, single_buf in attempts:
        try:
            return _encoder_impl(support_x, support_y, prepared_params,
                                 out_dim=out_dim, tm=tm, rows_pad=rows_pad,
                                 semantics=sem, single_buffer_weights=single_buf)
        except Exception as e:  # compile-time rejection -> try next config
            last_err = e
    raise last_err


def encoder_forward_ref(support_x, support_y, params):
    """Plain-JAX reference for correctness check."""
    x = jnp.concatenate([support_x, support_y], axis=-1)
    h = x.astype(jnp.float32)
    for (w, b) in params:
        h = jnp.maximum(jnp.dot(h, w, preferred_element_type=jnp.float32) + b, 0.0)
    return h.astype(support_x.dtype)


if __name__ == "__main__":
    # Small shapes consistent with the module:
    #   task_batch_size B=2, context_set_size N=8,
    #   feature_dim Fx=28, outcome_dim Fy=4 -> encoder input dim 32
    #   encoder MLP sizes = [32, 64, 32]
    B, N, Fx, Fy = 2, 8, 28, 4
    sizes = [Fx + Fy, 64, 32]

    key = jax.random.PRNGKey(0)
    kx, ky, kp = jax.random.split(key, 3)
    support_x = jax.random.normal(kx, (B, N, Fx), jnp.float32)
    support_y = jax.random.normal(ky, (B, N, Fy), jnp.float32)
    params = init_mlp_params(kp, sizes)

    prepared = prepare_params(params)          # f32; pass dtype=jnp.bfloat16 if accuracy allows
    out_dim = sizes[-1]

    out = encoder_forward(support_x, support_y, prepared, out_dim=out_dim)
    out = jax.block_until_ready(out)

    ref = encoder_forward_ref(support_x, support_y, params)
    assert out.shape == (B, N, out_dim), out.shape
    # f32 params: fused matmul + zero-padding are exact up to fp accumulation order.
    assert jnp.allclose(out, ref, atol=1e-4, rtol=1e-4), (
        "mismatch vs reference, max abs err = "
        f"{float(jnp.max(jnp.abs(out - ref)))}")

    print("KERNEL_OK")
</pallas_src>

<mosaic_0001>
module attributes {stable_mosaic.version = 11 : i64} {
  func.func @kernel(%arg0: i32, %arg1: memref<16x32xf32, #tpu.memory_space<vmem>>, %arg2: memref<32x128xf32, #tpu.memory_space<vmem>>, %arg3: memref<1x128xf32, #tpu.memory_space<vmem>>, %arg4: memref<128x128xf32, #tpu.memory_space<vmem>>, %arg5: memref<1x128xf32, #tpu.memory_space<vmem>>, %arg6: memref<16x128xf32, #tpu.memory_space<vmem>>) attributes {dimension_semantics = [#tpu.dimension_semantics<parallel>], iteration_bounds = array<i64: 1>, scalar_prefetch = 0 : i64, scratch_operands = 0 : i64, tpu.core_type = #tpu.core_type<tc>, window_params = [{transform_indices = @transform_0, window_bounds = array<i64: 16, 32>}, {pipeline_mode = #tpu.pipeline_mode<synchronous>, transform_indices = @transform_1, window_bounds = array<i64: 32, 128>}, {pipeline_mode = #tpu.pipeline_mode<synchronous>, transform_indices = @transform_2, window_bounds = array<i64: 1, 128>}, {pipeline_mode = #tpu.pipeline_mode<synchronous>, transform_indices = @transform_3, window_bounds = array<i64: 128, 128>}, {pipeline_mode = #tpu.pipeline_mode<synchronous>, transform_indices = @transform_4, window_bounds = array<i64: 1, 128>}, {transform_indices = @transform_5, window_bounds = array<i64: 16, 128>}]} {
    %c0 = arith.constant 0 : index
    %c0_0 = arith.constant 0 : index
    %0 = vector.load %arg1[%c0, %c0_0] : memref<16x32xf32, #tpu.memory_space<vmem>>, vector<16x32xf32>
    %c0_1 = arith.constant 0 : index
    %c0_2 = arith.constant 0 : index
    %1 = vector.load %arg2[%c0_1, %c0_2] : memref<32x128xf32, #tpu.memory_space<vmem>>, vector<32x128xf32>
    %c0_3 = arith.constant 0 : index
    %c0_4 = arith.constant 0 : index
    %2 = vector.load %arg3[%c0_3, %c0_4] : memref<1x128xf32, #tpu.memory_space<vmem>>, vector<1x128xf32>
    %cst = arith.constant dense<0.000000e+00> : vector<16x128xf32>
    %3 = tpu.matmul %0, %1, %cst {dimension_numbers = #tpu.dot_dimension_numbers<[1], [0], [0], [1], [0, 0, 1, 1], [], []>} : vector<16x32xf32>, vector<32x128xf32>, vector<16x128xf32> -> vector<16x128xf32>
    %4 = vector.broadcast %2 : vector<1x128xf32> to vector<16x128xf32>
    %5 = arith.addf %3, %4 : vector<16x128xf32>
    %cst_5 = arith.constant 0.000000e+00 : f32
    %6 = vector.broadcast %cst_5 : f32 to vector<16x128xf32>
    %7 = arith.maximumf %5, %6 : vector<16x128xf32>
    %c0_6 = arith.constant 0 : index
    %c0_7 = arith.constant 0 : index
    %8 = vector.load %arg4[%c0_6, %c0_7] : memref<128x128xf32, #tpu.memory_space<vmem>>, vector<128x128xf32>
    %c0_8 = arith.constant 0 : index
    %c0_9 = arith.constant 0 : index
    %9 = vector.load %arg5[%c0_8, %c0_9] : memref<1x128xf32, #tpu.memory_space<vmem>>, vector<1x128xf32>
    %cst_10 = arith.constant dense<0.000000e+00> : vector<16x128xf32>
    %10 = tpu.matmul %7, %8, %cst_10 {dimension_numbers = #tpu.dot_dimension_numbers<[1], [0], [0], [1], [0, 0, 1, 1], [], []>} : vector<16x128xf32>, vector<128x128xf32>, vector<16x128xf32> -> vector<16x128xf32>
    %11 = vector.broadcast %9 : vector<1x128xf32> to vector<16x128xf32>
    %12 = arith.addf %10, %11 : vector<16x128xf32>
    %cst_11 = arith.constant 0.000000e+00 : f32
    %13 = vector.broadcast %cst_11 : f32 to vector<16x128xf32>
    %14 = arith.maximumf %12, %13 : vector<16x128xf32>
    %c0_12 = arith.constant 0 : index
    %c0_13 = arith.constant 0 : index
    %15 = vector.load %arg6[%c0_12, %c0_13] : memref<16x128xf32, #tpu.memory_space<vmem>>, vector<16x128xf32>
    tpu.vector_store %arg6[%c0_12, %c0_13], %14 {strides = array<i32>} : memref<16x128xf32, #tpu.memory_space<vmem>>, vector<16x128xf32>,
    return
  }
  func.func @transform_0(%arg0: i32) -> (i32, i32) {
    %c0_i32 = arith.constant 0 : i32
    %c0_i32_0 = arith.constant 0 : i32
    return %arg0, %c0_i32 : i32, i32
  }
  func.func @transform_1(%arg0: i32) -> (i32, i32) {
    %c0_i32 = arith.constant 0 : i32
    %c0_i32_0 = arith.constant 0 : i32
    %c0_i32_1 = arith.constant 0 : i32
    return %c0_i32, %c0_i32_0 : i32, i32
  }
  func.func @transform_2(%arg0: i32) -> (i32, i32) {
    %c0_i32 = arith.constant 0 : i32
    %c0_i32_0 = arith.constant 0 : i32
    %c0_i32_1 = arith.constant 0 : i32
    return %c0_i32, %c0_i32_0 : i32, i32
  }
  func.func @transform_3(%arg0: i32) -> (i32, i32) {
    %c0_i32 = arith.constant 0 : i32
    %c0_i32_0 = arith.constant 0 : i32
    %c0_i32_1 = arith.constant 0 : i32
    return %c0_i32, %c0_i32_0 : i32, i32
  }
  func.func @transform_4(%arg0: i32) -> (i32, i32) {
    %c0_i32 = arith.constant 0 : i32
    %c0_i32_0 = arith.constant 0 : i32
    %c0_i32_1 = arith.constant 0 : i32
    return %c0_i32, %c0_i32_0 : i32, i32
  }
  func.func @transform_5(%arg0: i32) -> (i32, i32) {
    %c0_i32 = arith.constant 0 : i32
    %c0_i32_0 = arith.constant 0 : i32
    return %arg0, %c0_i32 : i32, i32
  }
}

module attributes {stable_mosaic.version = 11 : i64} {
  func.func @kernel(%arg0: i32, %arg1: memref<16x32xf32, #tpu.memory_space<vmem>>, %arg2: memref<32x128xf32, #tpu.memory_space<vmem>>, %arg3: memref<1x128xf32, #tpu.memory_space<vmem>>, %arg4: memref<128x128xf32, #tpu.memory_space<vmem>>, %arg5: memref<1x128xf32, #tpu.memory_space<vmem>>, %arg6: memref<16x128xf32, #tpu.memory_space<vmem>>) attributes {dimension_semantics = [#tpu.dimension_semantics<parallel>], iteration_bounds = array<i64: 1>, scalar_prefetch = 0 : i64, scratch_operands = 0 : i64, tpu.core_type = #tpu.core_type<tc>, window_params = [{transform_indices = @transform_0, window_bounds = array<i64: 16, 32>}, {pipeline_mode = #tpu.pipeline_mode<synchronous>, transform_indices = @transform_1, window_bounds = array<i64: 32, 128>}, {pipeline_mode = #tpu.pipeline_mode<synchronous>, transform_indices = @transform_2, window_bounds = array<i64: 1, 128>}, {pipeline_mode = #tpu.pipeline_mode<synchronous>, transform_indices = @transform_3, window_bounds = array<i64: 128, 128>}, {pipeline_mode = #tpu.pipeline_mode<synchronous>, transform_indices = @transform_4, window_bounds = array<i64: 1, 128>}, {transform_indices = @transform_5, window_bounds = array<i64: 16, 128>}]} {
    %c0 = arith.constant 0 : index
    %c0_0 = arith.constant 0 : index
    %0 = vector.load %arg1[%c0, %c0_0] : memref<16x32xf32, #tpu.memory_space<vmem>>, vector<16x32xf32>
    %c0_1 = arith.constant 0 : index
    %c0_2 = arith.constant 0 : index
    %1 = vector.load %arg2[%c0_1, %c0_2] : memref<32x128xf32, #tpu.memory_space<vmem>>, vector<32x128xf32>
    %c0_3 = arith.constant 0 : index
    %c0_4 = arith.constant 0 : index
    %2 = vector.load %arg3[%c0_3, %c0_4] : memref<1x128xf32, #tpu.memory_space<vmem>>, vector<1x128xf32>
    %cst = arith.constant dense<0.000000e+00> : vector<16x128xf32>
    %3 = tpu.matmul %0, %1, %cst {dimension_numbers = #tpu.dot_dimension_numbers<[1], [0], [0], [1], [0, 0, 1, 1], [], []>} : vector<16x32xf32>, vector<32x128xf32>, vector<16x128xf32> -> vector<16x128xf32>
    %4 = vector.broadcast %2 : vector<1x128xf32> to vector<16x128xf32>
    %5 = arith.addf %3, %4 : vector<16x128xf32>
    %cst_5 = arith.constant 0.000000e+00 : f32
    %6 = vector.broadcast %cst_5 : f32 to vector<16x128xf32>
    %7 = arith.maximumf %5, %6 : vector<16x128xf32>
    %c0_6 = arith.constant 0 : index
    %c0_7 = arith.constant 0 : index
    %8 = vector.load %arg4[%c0_6, %c0_7] : memref<128x128xf32, #tpu.memory_space<vmem>>, vector<128x128xf32>
    %c0_8 = arith.constant 0 : index
    %c0_9 = arith.constant 0 : index
    %9 = vector.load %arg5[%c0_8, %c0_9] : memref<1x128xf32, #tpu.memory_space<vmem>>, vector<1x128xf32>
    %cst_10 = arith.constant dense<0.000000e+00> : vector<16x128xf32>
    %10 = tpu.matmul %7, %8, %cst_10 {dimension_numbers = #tpu.dot_dimension_numbers<[1], [0], [0], [1], [0, 0, 1, 1], [], []>} : vector<16x128xf32>, vector<128x128xf32>, vector<16x128xf32> -> vector<16x128xf32>
    %11 = vector.broadcast %9 : vector<1x128xf32> to vector<16x128xf32>
    %12 = arith.addf %10, %11 : vector<16x128xf32>
    %cst_11 = arith.constant 0.000000e+00 : f32
    %13 = vector.broadcast %cst_11 : f32 to vector<16x128xf32>
    %14 = arith.maximumf %12, %13 : vector<16x128xf32>
    %c0_12 = arith.constant 0 : index
    %c0_13 = arith.constant 0 : index
    %15 = vector.load %arg6[%c0_12, %c0_13] : memref<16x128xf32, #tpu.memory_space<vmem>>, vector<16x128xf32>
    tpu.vector_store %arg6[%c0_12, %c0_13], %14 {strides = array<i32>} : memref<16x128xf32, #tpu.memory_space<vmem>>, vector<16x128xf32>,
    return
  }
  func.func @transform_0(%arg0: i32) -> (i32, i32) {
    %c0_i32 = arith.constant 0 : i32
    %c0_i32_0 = arith.constant 0 : i32
    return %arg0, %c0_i32 : i32, i32
  }
  func.func @transform_1(%arg0: i32) -> (i32, i32) {
    %c0_i32 = arith.constant 0 : i32
    %c0_i32_0 = arith.constant 0 : i32
    %c0_i32_1 = arith.constant 0 : i32
    return %c0_i32, %c0_i32_0 : i32, i32
  }
  func.func @transform_2(%arg0: i32) -> (i32, i32) {
    %c0_i32 = arith.constant 0 : i32
    %c0_i32_0 = arith.constant 0 : i32
    %c0_i32_1 = arith.constant 0 : i32
    return %c0_i32, %c0_i32_0 : i32, i32
  }
  func.func @transform_3(%arg0: i32) -> (i32, i32) {
    %c0_i32 = arith.constant 0 : i32
    %c0_i32_0 = arith.constant 0 : i32
    %c0_i32_1 = arith.constant 0 : i32
    return %c0_i32, %c0_i32_0 : i32, i32
  }
  func.func @transform_4(%arg0: i32) -> (i32, i32) {
    %c0_i32 = arith.constant 0 : i32
    %c0_i32_0 = arith.constant 0 : i32
    %c0_i32_1 = arith.constant 0 : i32
    return %c0_i32, %c0_i32_0 : i32, i32
  }
  func.func @transform_5(%arg0: i32) -> (i32, i32) {
    %c0_i32 = arith.constant 0 : i32
    %c0_i32_0 = arith.constant 0 : i32
    return %arg0, %c0_i32 : i32, i32
  }
}

</mosaic_0001>

<llo_original>
// kernel: _encoder_impl.1
$region0: #{_encoder_impl.1}
  #allocation0 [shape = 'u32[]', space=smem, size = 0x4, offset = 0x4, fixed_abs, tag = 'smem constant byte address 0x4 - core index']
  #allocation1 [shape = 'u32[144,128]{1,0:T(1,128)}', space=vmem, size = 0x12000, scoped, tag = 'internal scratch']
  %s0 = inlined_call_operand.vmem [shape: f32[16,32], index: 0, kind: input, shape index: {}]
  %s1 = inlined_call_operand.vmem [shape: f32[32,128], index: 1, kind: input, shape index: {}]
  %s2 = inlined_call_operand.vmem [shape: f32[1,128], index: 2, kind: input, shape index: {}]
  %s3 = inlined_call_operand.hbm [shape: f32[128,128], index: 3, kind: input, shape index: {}]
  %s4 = inlined_call_operand.vmem [shape: f32[1,128], index: 4, kind: input, shape index: {}]
  %s5 = inlined_call_operand.vmem [shape: f32[16,128], index: 5, kind: output, shape index: {}]
  %s6 = sld [smem:[#allocation0]]
  $region34: #{_encoder_impl.1} parent=0
    _
  %s8 = ssub.s32 1, %s6
  %s9 = scalar_select 0, %s8, %s6
  $region1: #{_encoder_impl.1} parent=0
    #allocation2 [shape = 'u8[65536]{0}', space=vmem, size = 0x10000, scoped, tag = 'input window, operand 3, single buffered']
    #allocation3 [shape = 's32[1]{0}', space=sflag, size = 0x4, scoped, tag = 'scoped memory for _encoder_impl.1']
    %10 = vsyncpa [#allocation3], 0
    // Predicated region
    $region2: #{_encoder_impl.1} parent=1 // pred_check
      _
    $region3: #{_encoder_impl.1} parent=1 // pred_check_branch
      %12 = sbr.rel (0) target = $region5
    $region4: #{_encoder_impl.1} parent=1 // pred_region
      _
    $region5: #{_encoder_impl.1} parent=1 // pred_fallthru
      _
    // Predicated region
    $region6: #{_encoder_impl.1} parent=1 // pred_check
      _
    $region7: #{_encoder_impl.1} parent=1 // pred_check_branch
      %14 = sbr.rel (0) target = $region9
    $region8: #{_encoder_impl.1} parent=1 // pred_region
      _
    $region9: #{_encoder_impl.1} parent=1 // pred_fallthru
      _
    // Predicated region
    $region10: #{_encoder_impl.1} parent=1 // pred_check
      _
    $region11: #{_encoder_impl.1} parent=1 // pred_check_branch
      %16 = sbr.rel (0) target = $region13
    $region12: #{_encoder_impl.1} parent=1 // pred_region
      _
    $region13: #{_encoder_impl.1} parent=1 // pred_fallthru
      _
    // Predicated region
    $region14: #{_encoder_impl.1} parent=1 // pred_check
      _
    $region15: #{_encoder_impl.1} parent=1 // pred_check_branch
      %18 = sbr.rel (0) target = $region17
    $region16: #{_encoder_impl.1} parent=1 // pred_region
      %s20 = ssub.s32 2048, 2048
      %21 = vsyncadd [#allocation3], %s20
      %s22 = sshll.u32 [#allocation2], 4
      %s23 = int_to_ptr.vmem [resolvable:$true] %s22
      %28 = dma.hbm_to_vmem [thread:$0]  %s3, 2048, %s23, [#allocation3], 128, 128, 8
    $region17: #{_encoder_impl.1} parent=1 // pred_fallthru
      _
    // Predicated region
    $region18: #{_encoder_impl.1} parent=1 // pred_check
      _
    $region19: #{_encoder_impl.1} parent=1 // pred_check_branch
      %30 = sbr.rel (0) target = $region21
    $region20: #{_encoder_impl.1} parent=1 // pred_region
      _
    $region21: #{_encoder_impl.1} parent=1 // pred_fallthru
      _
    // Predicated region
    $region22: #{_encoder_impl.1} parent=1 // pred_check
      _
    $region23: #{_encoder_impl.1} parent=1 // pred_check_branch
      %32 = sbr.rel (0) target = $region25
    $region24: #{_encoder_impl.1} parent=1 // pred_region
      %33 = dma.done [#allocation3], 2048
    $region25: #{_encoder_impl.1} parent=1 // pred_fallthru
      _
    %v34 = vld [vmem:[%s0] sm:$0xff]
    %v35 = vld [vmem:[%s0 + $0x8] sm:$0xff]
    %v36 = vld [vmem:[%s1] sm:$0xff]
    %v37 = vld [vmem:[%s1 + $0x8] sm:$0xff]
    %v38 = vld [vmem:[%s1 + $0x10] sm:$0xff]
    %v39 = vld [vmem:[%s1 + $0x18] sm:$0xff]
    %v40 = vld [vmem:[%s2] sm:$0x1]
    %v42 = vlaneseq
    %v43 = vshrl.u32 %v42, 7
    %v44 = vsub.s32 0, %v43
    %v45 = vrot.slane %v40, %v44
    %vm47 = vcmask 261120
    %v49 = vsel %vm47, %v34, 0
    %v52 = vsel %vm47, %v35, 0
    %54 = vmatprep.subr.mxu0 0.0
    %55 = vmatpush1.msra.mxu0 %v36
    %56 = vmatprep.subr.mxu0 0.0
    %57 = vmatpush1.msra.mxu0 %v37
    %58 = vmatprep.subr.mxu0 0.0
    %59 = vmatpush1.msra.mxu0 %v38
    %60 = vmatprep.subr.mxu0 0.0
    %61 = vmatpush1.msra.mxu0 %v39
    %62 = vmatprep.subr.mxu0 0.0
    %63 = vmatpush1.msra.mxu0 0.0
    %64 = vmatprep.subr.mxu0 0.0
    %65 = vmatpush1.msra.mxu0 0.0
    %66 = vmatprep.subr.mxu0 0.0
    %67 = vmatpush1.msra.mxu0 0.0
    %68 = vmatprep.subr.mxu0 0.0
    %69 = vmatpush1.msra.mxu0 0.0
    %70 = vmatprep.subr.mxu0 0.0
    %71 = vmatpush1.msra.mxu0 0.0
    %72 = vmatprep.subr.mxu0 0.0
    %73 = vmatpush1.msra.mxu0 0.0
    %74 = vmatprep.subr.mxu0 0.0
    %75 = vmatpush1.msra.mxu0 0.0
    %76 = vmatprep.subr.mxu0 0.0
    %77 = vmatpush1.msra.mxu0 0.0
    %78 = vmatprep.subr.mxu0 0.0
    %79 = vmatpush1.msra.mxu0 0.0
    %80 = vmatprep.subr.mxu0 0.0
    %81 = vmatpush1.msra.mxu0 0.0
    %82 = vmatprep.subr.mxu0 0.0
    %83 = vmatpush1.msra.mxu0 0.0
    %84 = vmatprep.subr.mxu0 0.0
    %85 = vmatpush1.msra.mxu0 0.0
    %86 = vmatprep.subr.mxu0 0.0
    %87 = vmatpush1.msra.mxu0 0.0
    %88 = vmatprep.subr.mxu0 0.0
    %89 = vmatpush1.msra.mxu0 0.0
    %90 = vmatprep.subr.mxu0 0.0
    %91 = vmatpush1.msra.mxu0 0.0
    %92 = vmatprep.subr.mxu0 0.0
    %93 = vmatpush1.msra.mxu0 0.0
    %94 = vmatprep.subr.mxu0 0.0
    %95 = vmatpush1.msra.mxu0 0.0
    %96 = vmatprep.subr.mxu0 0.0
    %97 = vmatpush1.msra.mxu0 0.0
    %98 = vmatprep.subr.mxu0 0.0
    %99 = vmatpush1.msra.mxu0 0.0
    %100 = vmatprep.subr.mxu0 0.0
    %101 = vmatpush1.msra.mxu0 0.0
    %102 = vmatprep.subr.mxu0 0.0
    %103 = vmatpush1.msra.mxu0 0.0
    %104 = vmatprep.subr.mxu0 0.0
    %105 = vmatpush1.msra.mxu0 0.0
    %106 = vmatprep.subr.mxu0 0.0
    %107 = vmatpush1.msra.mxu0 0.0
    %108 = vmatprep.subr.mxu0 0.0
    %109 = vmatpush1.msra.mxu0 0.0
    %110 = vmatprep.subr.mxu0 0.0
    %111 = vmatpush1.msra.mxu0 0.0
    %112 = vmatprep.subr.mxu0 0.0
    %113 = vmatpush1.msra.mxu0 0.0
    %114 = vmatprep.subr.mxu0 0.0
    %115 = vmatpush1.msra.mxu0 0.0
    %116 = vmatprep.subr.mxu0 0.0
    %117 = vmatpush1.msra.mxu0 0.0
    %118 = vmatprep.mubr.f32.mxu0 0.0
    %119 = vmatmul.mubr.f32.gmra.mrb[0].mxu0 %v49
    %v120 = vpop.f32.mrb[0].mxu0
    %v121 = vadd.f32 %v45, %v120
    %v122 = vpop.f32.mrb[0].mxu0
    %123 = vmatprep.mubr.f32.mxu0 0.0
    %124 = vmatmul.mubr.f32.gmra.mrb[0].mxu0 %v52
    %v125 = vpop.f32.mrb[0].mxu0
    %v126 = vadd.f32 %v45, %v125
    %v127 = vpop.f32.mrb[0].mxu0
    %128 = vdwg.mxu0
    %v129 = vmax.f32 %v121, 0.0
    %v130 = vmax.f32 %v126, 0.0
    %v131 = vld [vmem:[#allocation2] sm:$0xff]
    %v132 = vld [vmem:[#allocation2 + $0x8] sm:$0xff]
    %v133 = vld [vmem:[#allocation2 + $0x10] sm:$0xff]
    %v134 = vld [vmem:[#allocation2 + $0x18] sm:$0xff]
    %v135 = vld [vmem:[#allocation2 + $0x20] sm:$0xff]
    %v136 = vld [vmem:[#allocation2 + $0x28] sm:$0xff]
    %v137 = vld [vmem:[#allocation2 + $0x30] sm:$0xff]
    %v138 = vld [vmem:[#allocation2 + $0x38] sm:$0xff]
    %v139 = vld [vmem:[#allocation2 + $0x40] sm:$0xff]
    %v140 = vld [vmem:[#allocation2 + $0x48] sm:$0xff]
    %v141 = vld [vmem:[#allocation2 + $0x50] sm:$0xff]
    %v142 = vld [vmem:[#allocation2 + $0x58] sm:$0xff]
    %v143 = vld [vmem:[#allocation2 + $0x60] sm:$0xff]
    %v144 = vld [vmem:[#allocation2 + $0x68] sm:$0xff]
    %v145 = vld [vmem:[#allocation2 + $0x70] sm:$0xff]
    %v146 = vld [vmem:[#allocation2 + $0x78] sm:$0xff]
    %v147 = vld [vmem:[%s4] sm:$0x1]
    %v149 = vlaneseq
    %v150 = vshrl.u32 %v149, 7
    %v151 = vsub.s32 0, %v150
    %v152 = vrot.slane %v147, %v151
    %154 = vmatprep.subr.mxu0 0.0
    %155 = vmatpush1.msra.mxu0 %v131
    %156 = vmatprep.subr.mxu0 0.0
    %157 = vmatpush1.msra.mxu0 %v132
    %158 = vmatprep.subr.mxu0 0.0
    %159 = vmatpush1.msra.mxu0 %v133
    %160 = vmatprep.subr.mxu0 0.0
    %161 = vmatpush1.msra.mxu0 %v134
    %162 = vmatprep.subr.mxu0 0.0
    %163 = vmatpush1.msra.mxu0 %v135
    %164 = vmatprep.subr.mxu0 0.0
    %165 = vmatpush1.msra.mxu0 %v136
    %166 = vmatprep.subr.mxu0 0.0
    %167 = vmatpush1.msra.mxu0 %v137
    %168 = vmatprep.subr.mxu0 0.0
    %169 = vmatpush1.msra.mxu0 %v138
    %170 = vmatprep.subr.mxu0 0.0
    %171 = vmatpush1.msra.mxu0 %v139
    %172 = vmatprep.subr.mxu0 0.0
    %173 = vmatpush1.msra.mxu0 %v140
    %174 = vmatprep.subr.mxu0 0.0
    %175 = vmatpush1.msra.mxu0 %v141
    %176 = vmatprep.subr.mxu0 0.0
    %177 = vmatpush1.msra.mxu0 %v142
    %178 = vmatprep.subr.mxu0 0.0
    %179 = vmatpush1.msra.mxu0 %v143
    %180 = vmatprep.subr.mxu0 0.0
    %181 = vmatpush1.msra.mxu0 %v144
    %182 = vmatprep.subr.mxu0 0.0
    %183 = vmatpush1.msra.mxu0 %v145
    %184 = vmatprep.subr.mxu0 0.0
    %185 = vmatpush1.msra.mxu0 %v146
    %186 = vmatprep.subr.mxu0 0.0
    %187 = vmatpush1.msra.mxu0 0.0
    %188 = vmatprep.subr.mxu0 0.0
    %189 = vmatpush1.msra.mxu0 0.0
    %190 = vmatprep.subr.mxu0 0.0
    %191 = vmatpush1.msra.mxu0 0.0
    %192 = vmatprep.subr.mxu0 0.0
    %193 = vmatpush1.msra.mxu0 0.0
    %194 = vmatprep.subr.mxu0 0.0
    %195 = vmatpush1.msra.mxu0 0.0
    %196 = vmatprep.subr.mxu0 0.0
    %197 = vmatpush1.msra.mxu0 0.0
    %198 = vmatprep.subr.mxu0 0.0
    %199 = vmatpush1.msra.mxu0 0.0
    %200 = vmatprep.subr.mxu0 0.0
    %201 = vmatpush1.msra.mxu0 0.0
    %202 = vmatprep.subr.mxu0 0.0
    %203 = vmatpush1.msra.mxu0 0.0
    %204 = vmatprep.subr.mxu0 0.0
    %205 = vmatpush1.msra.mxu0 0.0
    %206 = vmatprep.subr.mxu0 0.0
    %207 = vmatpush1.msra.mxu0 0.0
    %208 = vmatprep.subr.mxu0 0.0
    %209 = vmatpush1.msra.mxu0 0.0
    %210 = vmatprep.subr.mxu0 0.0
    %211 = vmatpush1.msra.mxu0 0.0
    %212 = vmatprep.subr.mxu0 0.0
    %213 = vmatpush1.msra.mxu0 0.0
    %214 = vmatprep.subr.mxu0 0.0
    %215 = vmatpush1.msra.mxu0 0.0
    %216 = vmatprep.subr.mxu0 0.0
    %217 = vmatpush1.msra.mxu0 0.0
    %218 = vmatprep.mubr.f32.mxu0 0.0
    %219 = vmatmul.mubr.f32.gmra.mrb[0].mxu0 %v129
    %v220 = vpop.f32.mrb[0].mxu0
    %v221 = vadd.f32 %v152, %v220
    %v222 = vpop.f32.mrb[0].mxu0
    %223 = vmatprep.mubr.f32.mxu0 0.0
    %224 = vmatmul.mubr.f32.gmra.mrb[0].mxu0 %v130
    %v225 = vpop.f32.mrb[0].mxu0
    %v226 = vadd.f32 %v152, %v225
    %v227 = vpop.f32.mrb[0].mxu0
    %228 = vdwg.mxu0
    %v229 = vmax.f32 %v221, 0.0
    %v230 = vmax.f32 %v226, 0.0
    %231 = vst [vmem:[%s5] sm:$0xff] %v229
    %232 = vst [vmem:[%s5 + $0x8] sm:$0xff] %v230
    // Predicated region
    $region26: #{_encoder_impl.1} parent=1 // pred_check
      _
    $region27: #{_encoder_impl.1} parent=1 // pred_check_branch
      %234 = sbr.rel (0) target = $region29
    $region28: #{_encoder_impl.1} parent=1 // pred_region
      _
    $region29: #{_encoder_impl.1} parent=1 // pred_fallthru
      _
    // Predicated region
    $region30: #{_encoder_impl.1} parent=1 // pred_check
      _
    $region31: #{_encoder_impl.1} parent=1 // pred_check_branch
      %236 = sbr.rel (0) target = $region33
    $region32: #{_encoder_impl.1} parent=1 // pred_region
      _
    $region33: #{_encoder_impl.1} parent=1 // pred_fallthru
      _
    %237 = vsyncpa [#allocation3], 1

// kernel: _encoder_impl.1
$region0: #{_encoder_impl.1}
  #allocation0 [shape = 'u32[]', space=smem, size = 0x4, offset = 0x4, fixed_abs, tag = 'smem constant byte address 0x4 - core index']
  #allocation1 [shape = 'u32[144,128]{1,0:T(1,128)}', space=vmem, size = 0x12000, scoped, tag = 'internal scratch']
  %s0 = inlined_call_operand.vmem [shape: f32[16,32], index: 0, kind: input, shape index: {}]
  %s1 = inlined_call_operand.vmem [shape: f32[32,128], index: 1, kind: input, shape index: {}]
  %s2 = inlined_call_operand.vmem [shape: f32[1,128], index: 2, kind: input, shape index: {}]
  %s3 = inlined_call_operand.hbm [shape: f32[128,128], index: 3, kind: input, shape index: {}]
  %s4 = inlined_call_operand.vmem [shape: f32[1,128], index: 4, kind: input, shape index: {}]
  %s5 = inlined_call_operand.vmem [shape: f32[16,128], index: 5, kind: output, shape index: {}]
  %s6 = sld [smem:[#allocation0]]
  $region34: #{_encoder_impl.1} parent=0
    _
  %s8 = ssub.s32 1, %s6
  %s9 = scalar_select 0, %s8, %s6
  $region1: #{_encoder_impl.1} parent=0
    #allocation2 [shape = 'u8[65536]{0}', space=vmem, size = 0x10000, scoped, tag = 'input window, operand 3, single buffered']
    #allocation3 [shape = 's32[1]{0}', space=sflag, size = 0x4, scoped, tag = 'scoped memory for _encoder_impl.1']
    %10 = vsyncpa [#allocation3], 0
    // Predicated region
    $region2: #{_encoder_impl.1} parent=1 // pred_check
      _
    $region3: #{_encoder_impl.1} parent=1 // pred_check_branch
      %12 = sbr.rel (0) target = $region5
    $region4: #{_encoder_impl.1} parent=1 // pred_region
      _
    $region5: #{_encoder_impl.1} parent=1 // pred_fallthru
      _
    // Predicated region
    $region6: #{_encoder_impl.1} parent=1 // pred_check
      _
    $region7: #{_encoder_impl.1} parent=1 // pred_check_branch
      %14 = sbr.rel (0) target = $region9
    $region8: #{_encoder_impl.1} parent=1 // pred_region
      _
    $region9: #{_encoder_impl.1} parent=1 // pred_fallthru
      _
    // Predicated region
    $region10: #{_encoder_impl.1} parent=1 // pred_check
      _
    $region11: #{_encoder_impl.1} parent=1 // pred_check_branch
      %16 = sbr.rel (0) target = $region13
    $region12: #{_encoder_impl.1} parent=1 // pred_region
      _
    $region13: #{_encoder_impl.1} parent=1 // pred_fallthru
      _
    // Predicated region
    $region14: #{_encoder_impl.1} parent=1 // pred_check
      _
    $region15: #{_encoder_impl.1} parent=1 // pred_check_branch
      %18 = sbr.rel (0) target = $region17
    $region16: #{_encoder_impl.1} parent=1 // pred_region
      %s20 = ssub.s32 2048, 2048
      %21 = vsyncadd [#allocation3], %s20
      %s22 = sshll.u32 [#allocation2], 4
      %s23 = int_to_ptr.vmem [resolvable:$true] %s22
      %28 = dma.hbm_to_vmem [thread:$0]  %s3, 2048, %s23, [#allocation3], 128, 128, 8
    $region17: #{_encoder_impl.1} parent=1 // pred_fallthru
      _
    // Predicated region
    $region18: #{_encoder_impl.1} parent=1 // pred_check
      _
    $region19: #{_encoder_impl.1} parent=1 // pred_check_branch
      %30 = sbr.rel (0) target = $region21
    $region20: #{_encoder_impl.1} parent=1 // pred_region
      _
    $region21: #{_encoder_impl.1} parent=1 // pred_fallthru
      _
    // Predicated region
    $region22: #{_encoder_impl.1} parent=1 // pred_check
      _
    $region23: #{_encoder_impl.1} parent=1 // pred_check_branch
      %32 = sbr.rel (0) target = $region25
    $region24: #{_encoder_impl.1} parent=1 // pred_region
      %33 = dma.done [#allocation3], 2048
    $region25: #{_encoder_impl.1} parent=1 // pred_fallthru
      _
    %v34 = vld [vmem:[%s0] sm:$0xff]
    %v35 = vld [vmem:[%s0 + $0x8] sm:$0xff]
    %v36 = vld [vmem:[%s1] sm:$0xff]
    %v37 = vld [vmem:[%s1 + $0x8] sm:$0xff]
    %v38 = vld [vmem:[%s1 + $0x10] sm:$0xff]
    %v39 = vld [vmem:[%s1 + $0x18] sm:$0xff]
    %v40 = vld [vmem:[%s2] sm:$0x1]
    %v42 = vlaneseq
    %v43 = vshrl.u32 %v42, 7
    %v44 = vsub.s32 0, %v43
    %v45 = vrot.slane %v40, %v44
    %vm47 = vcmask 261120
    %v49 = vsel %vm47, %v34, 0
    %v52 = vsel %vm47, %v35, 0
    %54 = vmatprep.subr.mxu0 0.0
    %55 = vmatpush1.msra.mxu0 %v36
    %56 = vmatprep.subr.mxu0 0.0
    %57 = vmatpush1.msra.mxu0 %v37
    %58 = vmatprep.subr.mxu0 0.0
    %59 = vmatpush1.msra.mxu0 %v38
    %60 = vmatprep.subr.mxu0 0.0
    %61 = vmatpush1.msra.mxu0 %v39
    %62 = vmatprep.subr.mxu0 0.0
    %63 = vmatpush1.msra.mxu0 0.0
    %64 = vmatprep.subr.mxu0 0.0
    %65 = vmatpush1.msra.mxu0 0.0
    %66 = vmatprep.subr.mxu0 0.0
    %67 = vmatpush1.msra.mxu0 0.0
    %68 = vmatprep.subr.mxu0 0.0
    %69 = vmatpush1.msra.mxu0 0.0
    %70 = vmatprep.subr.mxu0 0.0
    %71 = vmatpush1.msra.mxu0 0.0
    %72 = vmatprep.subr.mxu0 0.0
    %73 = vmatpush1.msra.mxu0 0.0
    %74 = vmatprep.subr.mxu0 0.0
    %75 = vmatpush1.msra.mxu0 0.0
    %76 = vmatprep.subr.mxu0 0.0
    %77 = vmatpush1.msra.mxu0 0.0
    %78 = vmatprep.subr.mxu0 0.0
    %79 = vmatpush1.msra.mxu0 0.0
    %80 = vmatprep.subr.mxu0 0.0
    %81 = vmatpush1.msra.mxu0 0.0
    %82 = vmatprep.subr.mxu0 0.0
    %83 = vmatpush1.msra.mxu0 0.0
    %84 = vmatprep.subr.mxu0 0.0
    %85 = vmatpush1.msra.mxu0 0.0
    %86 = vmatprep.subr.mxu0 0.0
    %87 = vmatpush1.msra.mxu0 0.0
    %88 = vmatprep.subr.mxu0 0.0
    %89 = vmatpush1.msra.mxu0 0.0
    %90 = vmatprep.subr.mxu0 0.0
    %91 = vmatpush1.msra.mxu0 0.0
    %92 = vmatprep.subr.mxu0 0.0
    %93 = vmatpush1.msra.mxu0 0.0
    %94 = vmatprep.subr.mxu0 0.0
    %95 = vmatpush1.msra.mxu0 0.0
    %96 = vmatprep.subr.mxu0 0.0
    %97 = vmatpush1.msra.mxu0 0.0
    %98 = vmatprep.subr.mxu0 0.0
    %99 = vmatpush1.msra.mxu0 0.0
    %100 = vmatprep.subr.mxu0 0.0
    %101 = vmatpush1.msra.mxu0 0.0
    %102 = vmatprep.subr.mxu0 0.0
    %103 = vmatpush1.msra.mxu0 0.0
    %104 = vmatprep.subr.mxu0 0.0
    %105 = vmatpush1.msra.mxu0 0.0
    %106 = vmatprep.subr.mxu0 0.0
    %107 = vmatpush1.msra.mxu0 0.0
    %108 = vmatprep.subr.mxu0 0.0
    %109 = vmatpush1.msra.mxu0 0.0
    %110 = vmatprep.subr.mxu0 0.0
    %111 = vmatpush1.msra.mxu0 0.0
    %112 = vmatprep.subr.mxu0 0.0
    %113 = vmatpush1.msra.mxu0 0.0
    %114 = vmatprep.subr.mxu0 0.0
    %115 = vmatpush1.msra.mxu0 0.0
    %116 = vmatprep.subr.mxu0 0.0
    %117 = vmatpush1.msra.mxu0 0.0
    %118 = vmatprep.mubr.f32.mxu0 0.0
    %119 = vmatmul.mubr.f32.gmra.mrb[0].mxu0 %v49
    %v120 = vpop.f32.mrb[0].mxu0
    %v121 = vadd.f32 %v45, %v120
    %v122 = vpop.f32.mrb[0].mxu0
    %123 = vmatprep.mubr.f32.mxu0 0.0
    %124 = vmatmul.mubr.f32.gmra.mrb[0].mxu0 %v52
    %v125 = vpop.f32.mrb[0].mxu0
    %v126 = vadd.f32 %v45, %v125
    %v127 = vpop.f32.mrb[0].mxu0
    %128 = vdwg.mxu0
    %v129 = vmax.f32 %v121, 0.0
    %v130 = vmax.f32 %v126, 0.0
    %v131 = vld [vmem:[#allocation2] sm:$0xff]
    %v132 = vld [vmem:[#allocation2 + $0x8] sm:$0xff]
    %v133 = vld [vmem:[#allocation2 + $0x10] sm:$0xff]
    %v134 = vld [vmem:[#allocation2 + $0x18] sm:$0xff]
    %v135 = vld [vmem:[#allocation2 + $0x20] sm:$0xff]
    %v136 = vld [vmem:[#allocation2 + $0x28] sm:$0xff]
    %v137 = vld [vmem:[#allocation2 + $0x30] sm:$0xff]
    %v138 = vld [vmem:[#allocation2 + $0x38] sm:$0xff]
    %v139 = vld [vmem:[#allocation2 + $0x40] sm:$0xff]
    %v140 = vld [vmem:[#allocation2 + $0x48] sm:$0xff]
    %v141 = vld [vmem:[#allocation2 + $0x50] sm:$0xff]
    %v142 = vld [vmem:[#allocation2 + $0x58] sm:$0xff]
    %v143 = vld [vmem:[#allocation2 + $0x60] sm:$0xff]
    %v144 = vld [vmem:[#allocation2 + $0x68] sm:$0xff]
    %v145 = vld [vmem:[#allocation2 + $0x70] sm:$0xff]
    %v146 = vld [vmem:[#allocation2 + $0x78] sm:$0xff]
    %v147 = vld [vmem:[%s4] sm:$0x1]
    %v149 = vlaneseq
    %v150 = vshrl.u32 %v149, 7
    %v151 = vsub.s32 0, %v150
    %v152 = vrot.slane %v147, %v151
    %154 = vmatprep.subr.mxu0 0.0
    %155 = vmatpush1.msra.mxu0 %v131
    %156 = vmatprep.subr.mxu0 0.0
    %157 = vmatpush1.msra.mxu0 %v132
    %158 = vmatprep.subr.mxu0 0.0
    %159 = vmatpush1.msra.mxu0 %v133
    %160 = vmatprep.subr.mxu0 0.0
    %161 = vmatpush1.msra.mxu0 %v134
    %162 = vmatprep.subr.mxu0 0.0
    %163 = vmatpush1.msra.mxu0 %v135
    %164 = vmatprep.subr.mxu0 0.0
    %165 = vmatpush1.msra.mxu0 %v136
    %166 = vmatprep.subr.mxu0 0.0
    %167 = vmatpush1.msra.mxu0 %v137
    %168 = vmatprep.subr.mxu0 0.0
    %169 = vmatpush1.msra.mxu0 %v138
    %170 = vmatprep.subr.mxu0 0.0
    %171 = vmatpush1.msra.mxu0 %v139
    %172 = vmatprep.subr.mxu0 0.0
    %173 = vmatpush1.msra.mxu0 %v140
    %174 = vmatprep.subr.mxu0 0.0
    %175 = vmatpush1.msra.mxu0 %v141
    %176 = vmatprep.subr.mxu0 0.0
    %177 = vmatpush1.msra.mxu0 %v142
    %178 = vmatprep.subr.mxu0 0.0
    %179 = vmatpush1.msra.mxu0 %v143
    %180 = vmatprep.subr.mxu0 0.0
    %181 = vmatpush1.msra.mxu0 %v144
    %182 = vmatprep.subr.mxu0 0.0
    %183 = vmatpush1.msra.mxu0 %v145
    %184 = vmatprep.subr.mxu0 0.0
    %185 = vmatpush1.msra.mxu0 %v146
    %186 = vmatprep.subr.mxu0 0.0
    %187 = vmatpush1.msra.mxu0 0.0
    %188 = vmatprep.subr.mxu0 0.0
    %189 = vmatpush1.msra.mxu0 0.0
    %190 = vmatprep.subr.mxu0 0.0
    %191 = vmatpush1.msra.mxu0 0.0
    %192 = vmatprep.subr.mxu0 0.0
    %193 = vmatpush1.msra.mxu0 0.0
    %194 = vmatprep.subr.mxu0 0.0
    %195 = vmatpush1.msra.mxu0 0.0
    %196 = vmatprep.subr.mxu0 0.0
    %197 = vmatpush1.msra.mxu0 0.0
    %198 = vmatprep.subr.mxu0 0.0
    %199 = vmatpush1.msra.mxu0 0.0
    %200 = vmatprep.subr.mxu0 0.0
    %201 = vmatpush1.msra.mxu0 0.0
    %202 = vmatprep.subr.mxu0 0.0
    %203 = vmatpush1.msra.mxu0 0.0
    %204 = vmatprep.subr.mxu0 0.0
    %205 = vmatpush1.msra.mxu0 0.0
    %206 = vmatprep.subr.mxu0 0.0
    %207 = vmatpush1.msra.mxu0 0.0
    %208 = vmatprep.subr.mxu0 0.0
    %209 = vmatpush1.msra.mxu0 0.0
    %210 = vmatprep.subr.mxu0 0.0
    %211 = vmatpush1.msra.mxu0 0.0
    %212 = vmatprep.subr.mxu0 0.0
    %213 = vmatpush1.msra.mxu0 0.0
    %214 = vmatprep.subr.mxu0 0.0
    %215 = vmatpush1.msra.mxu0 0.0
    %216 = vmatprep.subr.mxu0 0.0
    %217 = vmatpush1.msra.mxu0 0.0
    %218 = vmatprep.mubr.f32.mxu0 0.0
    %219 = vmatmul.mubr.f32.gmra.mrb[0].mxu0 %v129
    %v220 = vpop.f32.mrb[0].mxu0
    %v221 = vadd.f32 %v152, %v220
    %v222 = vpop.f32.mrb[0].mxu0
    %223 = vmatprep.mubr.f32.mxu0 0.0
    %224 = vmatmul.mubr.f32.gmra.mrb[0].mxu0 %v130
    %v225 = vpop.f32.mrb[0].mxu0
    %v226 = vadd.f32 %v152, %v225
    %v227 = vpop.f32.mrb[0].mxu0
    %228 = vdwg.mxu0
    %v229 = vmax.f32 %v221, 0.0
    %v230 = vmax.f32 %v226, 0.0
    %231 = vst [vmem:[%s5] sm:$0xff] %v229
    %232 = vst [vmem:[%s5 + $0x8] sm:$0xff] %v230
    // Predicated region
    $region26: #{_encoder_impl.1} parent=1 // pred_check
      _
    $region27: #{_encoder_impl.1} parent=1 // pred_check_branch
      %234 = sbr.rel (0) target = $region29
    $region28: #{_encoder_impl.1} parent=1 // pred_region
      _
    $region29: #{_encoder_impl.1} parent=1 // pred_fallthru
      _
    // Predicated region
    $region30: #{_encoder_impl.1} parent=1 // pred_check
      _
    $region31: #{_encoder_impl.1} parent=1 // pred_check_branch
      %236 = sbr.rel (0) target = $region33
    $region32: #{_encoder_impl.1} parent=1 // pred_region
      _
    $region33: #{_encoder_impl.1} parent=1 // pred_fallthru
      _
    %237 = vsyncpa [#allocation3], 1

</llo_original>
